<compile_context>
chip_gen: v7x
topology: tpu7x:2x2x1
jax: 0.10.0
libtpu: 0.0.40
codegen_flags: <defaults>
</compile_context>

<pallas_src>
import functools

import jax
import jax.numpy as jnp
import numpy as np
from jax.experimental import pallas as pl
from jax.experimental.pallas import tpu as pltpu

# Padding sentinel for survival times: padded j columns never enter a real
# risk set (any real surv time > sentinel); padded i rows are killed exactly
# by censor == 0 (their risk sum stays > 0, so log() is finite, no NaN).
_NEG_SENTINEL = -3.0e38


def _round_up(x, m):
    return (x + m - 1) // m * m


def _pick_tile(n_pad, target):
    """Largest multiple-of-128 divisor of n_pad that is <= target (>= 128)."""
    m = n_pad // 128
    best = 1
    for d in range(1, m + 1):
        if m % d == 0 and 128 * d <= target:
            best = d
    return 128 * best


def _cox_kernel(surv_row_ref, censor_row_ref, theta_row_ref,
                surv_col_ref, exp_theta_col_ref,
                cox_ref, risk_acc_ref):
    # Grid = (i tiles over output samples, k tiles over the risk set).
    # CORRECTNESS GUARD: the reduction axis k MUST stay the innermost
    # (fastest-varying) grid axis and MUST stay "arbitrary"; the (1, TN)
    # accumulator is reset at k == 0 and consumed at k == nk - 1 per i tile.
    k = pl.program_id(1)
    nk = pl.num_programs(1)

    @pl.when(k == 0)
    def _():
        risk_acc_ref[...] = jnp.zeros_like(risk_acc_ref)

    # ---- O(B^2) hot path: masked risk-set accumulation (pure VPU) ----------
    surv_row = surv_row_ref[...]                 # (1, TN)   surv[i]
    surv_col = surv_col_ref[...]                 # (TK, 1)   surv[j]
    exp_theta_col = exp_theta_col_ref[...]       # (TK, 1)   exp(theta[j])
    # masked[j, i] = exp(theta[j]) if surv[i] <= surv[j] else 0  (fused select)
    masked = jnp.where(surv_row <= surv_col, exp_theta_col, 0.0)   # (TK, TN)
    risk_acc_ref[...] += jnp.sum(masked, axis=0, keepdims=True)    # (1, TN)

    # ---- finalize: per-sample Cox terms (lane-dense output row) ------------
    @pl.when(k == nk - 1)
    def _():
        cox_ref[...] = ((theta_row_ref[...] - jnp.log(risk_acc_ref[...]))
                        * censor_row_ref[...])


def mixed_cox_loss_with_reg(model_params, preds, grad_labels, surv, censor,
                            *, lambda_cox, lambda_nll, lambda_reg):
    """JAX/Pallas equivalent of MixedCoxLossWithReg.forward."""
    B, C = preds.shape
    # Mirrors the torch broadcast constraint: exp(preds.view(-1)) * R_mat(B,B)
    # only broadcasts when B*C == B, i.e. C == 1.  For that shape,
    # nn.CrossEntropyLoss(preds, labels) is exactly 0 (log_softmax of a single
    # class), so the CE term is a compile-time constant 0.
    assert B * C == B, "CoxLoss broadcast requires preds of shape (B, 1)"
    del grad_labels  # CE is identically 0 for C == 1
    loss_ce = 0.0

    # ---- L1 parameter regularization: plain XLA, hoisted out of the kernel.
    loss_reg = sum(jnp.abs(p).astype(jnp.float32).sum()
                   for p in jax.tree_util.tree_leaves(model_params))

    # ---- padding (128-aligned only; tiles divide the padded size) ----------
    n_pad = _round_up(B, 128)
    pad = n_pad - B

    surv = surv.astype(jnp.float32)
    censor = censor.astype(jnp.float32)
    theta = preds.astype(jnp.float32).reshape(-1)

    # Explicit sentinel padding (do NOT switch to implicit pl.cdiv edge
    # blocks: garbage lanes would enter the risk set).
    surv_p = jnp.pad(surv, (0, pad), constant_values=_NEG_SENTINEL)
    censor_p = jnp.pad(censor, (0, pad))      # padded i rows contribute 0
    theta_p = jnp.pad(theta, (0, pad))        # exp(0)=1, excluded from real rows
    exp_theta_p = jnp.exp(theta_p)            # computed once, here

    surv_row = surv_p.reshape(1, n_pad)
    censor_row = censor_p.reshape(1, n_pad)
    theta_row = theta_p.reshape(1, n_pad)
    surv_col = surv_p.reshape(n_pad, 1)
    exp_theta_col = exp_theta_p.reshape(n_pad, 1)

    # ---- tile selection -----------------------------------------------------
    # TN: lane tile over output samples.  Keep >= 2 i tiles when possible so
    # the "parallel" axis can shard across v7x's two TensorCores.
    if n_pad >= 256:
        tn = _pick_tile(n_pad, min(512, n_pad // 2))
    else:
        tn = n_pad
    # TK: sublane tile over the risk set.  Collapses the reduction axis
    # entirely (num_k == 1) for moderate B; capped at 1024 so the per-step
    # (TK, TN) masked temporary stays <= 2 MiB and the unrolled op count
    # stays reasonable.
    tk = _pick_tile(n_pad, 1024)
    num_i = n_pad // tn
    num_k = n_pad // tk

    row_spec = pl.BlockSpec((1, tn), lambda i, k: (0, i))
    col_spec = pl.BlockSpec((tk, 1), lambda i, k: (k, 0))

    cox_terms = pl.pallas_call(
        _cox_kernel,
        out_shape=jax.ShapeDtypeStruct((1, n_pad), jnp.float32),
        grid=(num_i, num_k),
        in_specs=[row_spec, row_spec, row_spec, col_spec, col_spec],
        out_specs=pl.BlockSpec((1, tn), lambda i, k: (0, i)),
        scratch_shapes=[pltpu.VMEM((1, tn), jnp.float32)],
        compiler_params=pltpu.CompilerParams(
            dimension_semantics=("parallel", "arbitrary"),
            # Post-hoist VMEM use is only a few MiB (masked temp <= 2 MiB with
            # tk<=1024 / tn<=512, plus double-buffered row/col blocks); 32 MiB
            # is safe on every generation, including v7x (64 MiB physical).
            vmem_limit_bytes=32 * 1024 * 1024),
    )(surv_row, censor_row, theta_row, surv_col, exp_theta_col)

    loss_cox = -jnp.sum(cox_terms) / B   # mean over the real batch (padded terms are 0)
    # NOTE: exp(theta) without max-subtraction can overflow for |theta| >~ 88;
    # this exactly matches the torch reference's behavior.
    return (lambda_cox * loss_cox + lambda_nll * loss_ce
            + lambda_reg * loss_reg)


def _reference(model_params, preds, grad_labels, surv, censor,
               lambda_cox, lambda_nll, lambda_reg):
    """Pure-JAX reference mirroring the torch module."""
    theta = preds.reshape(-1)
    R = (surv[:, None] <= surv[None, :]).astype(jnp.float32)
    exp_theta = jnp.exp(theta)
    loss_cox = -jnp.mean(
        (theta - jnp.log(jnp.sum(exp_theta * R, axis=1))) * censor)
    loss_reg = sum(jnp.abs(p).sum()
                   for p in jax.tree_util.tree_leaves(model_params))
    logp = jax.nn.log_softmax(preds, axis=1)
    ce = -jnp.mean(logp[jnp.arange(preds.shape[0]), grad_labels])
    return lambda_cox * loss_cox + lambda_nll * ce + lambda_reg * loss_reg


if __name__ == "__main__":
    B, C, HIDDEN = 200, 1, 32          # pads to 256 -> 2 i tiles, 1 k tile
    lambda_cox, lambda_nll, lambda_reg = 1.0, 1.0, 3e-4

    key = jax.random.PRNGKey(0)
    k_w, k_b, k_p, k_s, k_c = jax.random.split(key, 5)

    # Synthetic "model" parameters (e.g. a Linear(HIDDEN -> 1) hazard head).
    model_params = (
        jax.random.normal(k_w, (1, HIDDEN), dtype=jnp.float32) * 0.1,  # weight
        jax.random.normal(k_b, (1,), dtype=jnp.float32) * 0.1,         # bias
    )

    preds = jax.random.normal(k_p, (B, C), dtype=jnp.float32)          # hazards
    surv = jax.random.uniform(k_s, (B,), dtype=jnp.float32) * 10.0     # surv times
    censor = (jax.random.uniform(k_c, (B,)) > 0.5).astype(jnp.float32) # events
    grad_labels = jnp.zeros((B,), dtype=jnp.int32)                     # class ids

    loss_fn = jax.jit(functools.partial(
        mixed_cox_loss_with_reg,
        lambda_cox=lambda_cox, lambda_nll=lambda_nll, lambda_reg=lambda_reg))

    loss = jax.block_until_ready(
        loss_fn(model_params, preds, grad_labels, surv, censor))

    ref = _reference(model_params, preds, grad_labels, surv, censor,
                     lambda_cox, lambda_nll, lambda_reg)
    np.testing.assert_allclose(np.asarray(loss), np.asarray(ref),
                               rtol=1e-5, atol=1e-5)
    print("KERNEL_OK")
</pallas_src>

<mosaic_0001>
module attributes {stable_mosaic.version = 11 : i64} {
  func.func @_cox_kernel(%arg0: i32, %arg1: i32, %arg2: memref<1x128xf32, #tpu.memory_space<vmem>>, %arg3: memref<1x128xf32, #tpu.memory_space<vmem>>, %arg4: memref<1x128xf32, #tpu.memory_space<vmem>>, %arg5: memref<256x1xf32, #tpu.memory_space<vmem>>, %arg6: memref<256x1xf32, #tpu.memory_space<vmem>>, %arg7: memref<1x128xf32, #tpu.memory_space<vmem>>, %arg8: memref<1x128xf32, #tpu.memory_space<vmem>>) attributes {dimension_semantics = [#tpu.dimension_semantics<parallel>, #tpu.dimension_semantics<arbitrary>], iteration_bounds = array<i64: 2, 1>, scalar_prefetch = 0 : i64, scratch_operands = 1 : i64, tpu.core_type = #tpu.core_type<tc>, window_params = [{transform_indices = @transform_0, window_bounds = array<i64: 1, 128>}, {transform_indices = @transform_1, window_bounds = array<i64: 1, 128>}, {transform_indices = @transform_2, window_bounds = array<i64: 1, 128>}, {transform_indices = @transform_3, window_bounds = array<i64: 256, 1>}, {transform_indices = @transform_4, window_bounds = array<i64: 256, 1>}, {transform_indices = @transform_5, window_bounds = array<i64: 1, 128>}]} {
    %c0_i32 = arith.constant 0 : i32
    %0 = arith.cmpi eq, %arg1, %c0_i32 : i32
    %1 = arith.extui %0 : i1 to i32
    %c0_i32_0 = arith.constant 0 : i32
    %2 = arith.cmpi ne, %1, %c0_i32_0 : i32
    scf.if %2 {
      %cst_13 = arith.constant 0.000000e+00 : f32
      %21 = vector.broadcast %cst_13 : f32 to vector<1x128xf32>
      %c0_14 = arith.constant 0 : index
      %c0_15 = arith.constant 0 : index
      %22 = vector.load %arg8[%c0_14, %c0_15] : memref<1x128xf32, #tpu.memory_space<vmem>>, vector<1x128xf32>
      tpu.vector_store %arg8[%c0_14, %c0_15], %21 {strides = array<i32>} : memref<1x128xf32, #tpu.memory_space<vmem>>, vector<1x128xf32>,
    } else {
    }
    %c0 = arith.constant 0 : index
    %c0_1 = arith.constant 0 : index
    %3 = vector.load %arg2[%c0, %c0_1] : memref<1x128xf32, #tpu.memory_space<vmem>>, vector<1x128xf32>
    %c0_2 = arith.constant 0 : index
    %c0_3 = arith.constant 0 : index
    %4 = vector.load %arg5[%c0_2, %c0_3] : memref<256x1xf32, #tpu.memory_space<vmem>>, vector<256x1xf32>
    %c0_4 = arith.constant 0 : index
    %c0_5 = arith.constant 0 : index
    %5 = vector.load %arg6[%c0_4, %c0_5] : memref<256x1xf32, #tpu.memory_space<vmem>>, vector<256x1xf32>
    %6 = vector.broadcast %3 : vector<1x128xf32> to vector<256x128xf32>
    %7 = vector.broadcast %4 : vector<256x1xf32> to vector<256x128xf32>
    %8 = arith.cmpf ole, %6, %7 : vector<256x128xf32>
    %cst = arith.constant 0.000000e+00 : f32
    %9 = vector.shape_cast %5 : vector<256x1xf32> to vector<256x1xf32>
    %10 = vector.broadcast %9 : vector<256x1xf32> to vector<256x128xf32>
    %11 = vector.broadcast %cst : f32 to vector<256x128xf32>
    %12 = arith.select %8, %10, %11 : vector<256x128xi1>, vector<256x128xf32>
    %c0_6 = arith.constant 0 : index
    %c0_7 = arith.constant 0 : index
    %13 = vector.load %arg8[%c0_6, %c0_7] : memref<1x128xf32, #tpu.memory_space<vmem>>, vector<1x128xf32>
    %cst_8 = arith.constant dense<0.000000e+00> : vector<128xf32>
    %14 = vector.multi_reduction <add>, %12, %cst_8 [0] : vector<256x128xf32> to vector<128xf32>
    %15 = vector.shape_cast %14 : vector<128xf32> to vector<1x128xf32>
    %16 = arith.addf %13, %15 : vector<1x128xf32>
    %c0_9 = arith.constant 0 : index
    %c0_10 = arith.constant 0 : index
    %17 = vector.load %arg8[%c0_9, %c0_10] : memref<1x128xf32, #tpu.memory_space<vmem>>, vector<1x128xf32>
    tpu.vector_store %arg8[%c0_9, %c0_10], %16 {strides = array<i32>} : memref<1x128xf32, #tpu.memory_space<vmem>>, vector<1x128xf32>,
    %c0_i32_11 = arith.constant 0 : i32
    %18 = arith.cmpi eq, %arg1, %c0_i32_11 : i32
    %19 = arith.extui %18 : i1 to i32
    %c0_i32_12 = arith.constant 0 : i32
    %20 = arith.cmpi ne, %19, %c0_i32_12 : i32
    scf.if %20 {
      %c0_13 = arith.constant 0 : index
      %c0_14 = arith.constant 0 : index
      %21 = vector.load %arg4[%c0_13, %c0_14] : memref<1x128xf32, #tpu.memory_space<vmem>>, vector<1x128xf32>
      %c0_15 = arith.constant 0 : index
      %c0_16 = arith.constant 0 : index
      %22 = vector.load %arg8[%c0_15, %c0_16] : memref<1x128xf32, #tpu.memory_space<vmem>>, vector<1x128xf32>
      %23 = math.log %22 : vector<1x128xf32>
      %24 = arith.subf %21, %23 : vector<1x128xf32>
      %c0_17 = arith.constant 0 : index
      %c0_18 = arith.constant 0 : index
      %25 = vector.load %arg3[%c0_17, %c0_18] : memref<1x128xf32, #tpu.memory_space<vmem>>, vector<1x128xf32>
      %26 = arith.mulf %24, %25 : vector<1x128xf32>
      %c0_19 = arith.constant 0 : index
      %c0_20 = arith.constant 0 : index
      %27 = vector.load %arg7[%c0_19, %c0_20] : memref<1x128xf32, #tpu.memory_space<vmem>>, vector<1x128xf32>
      tpu.vector_store %arg7[%c0_19, %c0_20], %26 {strides = array<i32>} : memref<1x128xf32, #tpu.memory_space<vmem>>, vector<1x128xf32>,
    } else {
    }
    return
  }
  func.func @transform_0(%arg0: i32, %arg1: i32) -> (i32, i32) {
    %c0_i32 = arith.constant 0 : i32
    %c0_i32_0 = arith.constant 0 : i32
    return %c0_i32, %arg0 : i32, i32
  }
  func.func @transform_1(%arg0: i32, %arg1: i32) -> (i32, i32) {
    %c0_i32 = arith.constant 0 : i32
    %c0_i32_0 = arith.constant 0 : i32
    return %c0_i32, %arg0 : i32, i32
  }
  func.func @transform_2(%arg0: i32, %arg1: i32) -> (i32, i32) {
    %c0_i32 = arith.constant 0 : i32
    %c0_i32_0 = arith.constant 0 : i32
    return %c0_i32, %arg0 : i32, i32
  }
  func.func @transform_3(%arg0: i32, %arg1: i32) -> (i32, i32) {
    %c0_i32 = arith.constant 0 : i32
    %c0_i32_0 = arith.constant 0 : i32
    return %arg1, %c0_i32 : i32, i32
  }
  func.func @transform_4(%arg0: i32, %arg1: i32) -> (i32, i32) {
    %c0_i32 = arith.constant 0 : i32
    %c0_i32_0 = arith.constant 0 : i32
    return %arg1, %c0_i32 : i32, i32
  }
  func.func @transform_5(%arg0: i32, %arg1: i32) -> (i32, i32) {
    %c0_i32 = arith.constant 0 : i32
    %c0_i32_0 = arith.constant 0 : i32
    return %c0_i32, %arg0 : i32, i32
  }
}

</mosaic_0001>

<llo_original>
// kernel: mixed_cox_loss_with_reg.1
$region0: #{mixed_cox_loss_with_reg.1}
  #allocation0 [shape = 'u32[]', space=smem, size = 0x4, offset = 0x4, fixed_abs, tag = 'smem constant byte address 0x4 - core index']
  #allocation1 [shape = 'u32[144,128]{1,0:T(1,128)}', space=vmem, size = 0x12000, scoped, tag = 'internal scratch']
  #allocation2 [shape = 'f32[1,128]{1,0:T(1,128)}', space=vmem, size = 0x200, scoped, tag = 'scratch operand']
  %s0 = inlined_call_operand.vmem [shape: f32[1,256], index: 0, kind: input, shape index: {}]
  %s1 = inlined_call_operand.vmem [shape: f32[1,256], index: 1, kind: input, shape index: {}]
  %s2 = inlined_call_operand.vmem [shape: f32[1,256], index: 2, kind: input, shape index: {}]
  %s3 = inlined_call_operand.vmem [shape: f32[256,1], index: 3, kind: input, shape index: {}]
  %s4 = inlined_call_operand.vmem [shape: f32[256,1], index: 4, kind: input, shape index: {}]
  %s5 = inlined_call_operand.vmem [shape: f32[1,256], index: 5, kind: output, shape index: {}]
  %s6 = sld [smem:[#allocation0]]
  $region61: #{mixed_cox_loss_with_reg.1} parent=0
    _
  %s8 = ssub.s32 1, %s6
  %s9 = scalar_select 0, %s8, %s6
  loop: start=0, step=1, limit=4
  $region2: #{mixed_cox_loss_with_reg.1} parent=0 // loop_pre_header
    _
  $region3: #{mixed_cox_loss_with_reg.1} parent=0 // loop_header
    %s11 = sphi 0, %s15
    %p12 = scmp.ge.s32.totalorder %s11, 4
    %s18 = sphi 0, %s30
    %s19 = sphi 0, %s26
    %s20 = sphi 0, %s18
    %s21 = sphi 0, %s19
    %s22 = sphi 0, %s20
    %s23 = sphi 0, %s21
    %s33 = sphi 0, %s35
    %s36 = sphi 0, %s33
    %s37 = sphi 0, %s36
    %s53 = sphi 0, %s37
    %s59 = sphi 0, %s61
    %s62 = sphi 0, %s59
    %s63 = sphi 0, %s62
    %s79 = sphi 0, %s63
    %s85 = sphi 0, %s87
    %s88 = sphi 0, %s85
    %s89 = sphi 0, %s88
    %s105 = sphi 0, %s89
    %s111 = sphi 0, %s113
    %s114 = sphi 0, %s111
    %s115 = sphi 0, %s114
    %s131 = sphi 0, %s115
    %s137 = sphi 0, %s139
    %s140 = sphi 0, %s137
    %s141 = sphi 0, %s140
    %s157 = sphi 0, %s141
    %s163 = sphi 0, %s165
    %s166 = sphi 0, %s163
    %s167 = sphi 0, %s166
    %s183 = sphi 0, %s167
  $region4: #{mixed_cox_loss_with_reg.1} parent=0 // loop_header_branch
    %14 = sbr.rel (%p12) target = $region8
  $region5: #{mixed_cox_loss_with_reg.1} parent=0 // loop_body
    %s16 = ssub.s32 %s11, 1
    %s17 = ssub.s32 %s11, 2
    %s24 = sadd.s32 1, %s19
    %p25 = scmp.ge.s32.totalorder %s24, 1
    %s26 = scalar_select %p25, 0, %s24
    %s27 = sadd.s32 1, %s18
    %s28 = scalar_select %p25, %s27, %s18
    %p29 = scmp.ge.s32.totalorder %s28, 2
    %s30 = scalar_select %p29, 0, %s28
    %s31 = ssub.s32 %s18, %s30
    %p32 = scmp.eq.s32.totalorder %s31, 0
    %s34 = sadd.s32 %s33, 1
    %s35 = scalar_select %p32, %s33, %s34
    %p38 = pneg %p32
    %p39 = scmp.eq.s32.totalorder %s11, 1
    %p40 = por %p38, %p39
    %p41 = scmp.ne.s32.totalorder %s33, %s36
    %p42 = scmp.eq.s32.totalorder %s11, 0
    %p43 = por %p41, %p42
    %p44 = scmp.ne.s32.totalorder %s33, %s36
    %p45 = scmp.eq.s32.totalorder %s16, 1
    %p46 = por %p44, %p45
    %p47 = scmp.ne.s32.totalorder %s36, %s37
    %p48 = scmp.eq.s32.totalorder %s16, 0
    %p49 = por %p47, %p48
    %p50 = scmp.ne.s32.totalorder %s36, %s37
    %p51 = scmp.eq.s32.totalorder %s17, 1
    %p52 = por %p50, %p51
    %p54 = scmp.ne.s32.totalorder %s37, %s53
    %p55 = scmp.eq.s32.totalorder %s17, 0
    %p56 = por %p54, %p55
    %s57 = ssub.s32 %s18, %s30
    %p58 = scmp.eq.s32.totalorder %s57, 0
    %s60 = sadd.s32 %s59, 1
    %s61 = scalar_select %p58, %s59, %s60
    %p64 = pneg %p58
    %p65 = scmp.eq.s32.totalorder %s11, 1
    %p66 = por %p64, %p65
    %p67 = scmp.ne.s32.totalorder %s59, %s62
    %p68 = scmp.eq.s32.totalorder %s11, 0
    %p69 = por %p67, %p68
    %p70 = scmp.ne.s32.totalorder %s59, %s62
    %p71 = scmp.eq.s32.totalorder %s16, 1
    %p72 = por %p70, %p71
    %p73 = scmp.ne.s32.totalorder %s62, %s63
    %p74 = scmp.eq.s32.totalorder %s16, 0
    %p75 = por %p73, %p74
    %p76 = scmp.ne.s32.totalorder %s62, %s63
    %p77 = scmp.eq.s32.totalorder %s17, 1
    %p78 = por %p76, %p77
    %p80 = scmp.ne.s32.totalorder %s63, %s79
    %p81 = scmp.eq.s32.totalorder %s17, 0
    %p82 = por %p80, %p81
    %s83 = ssub.s32 %s18, %s30
    %p84 = scmp.eq.s32.totalorder %s83, 0
    %s86 = sadd.s32 %s85, 1
    %s87 = scalar_select %p84, %s85, %s86
    %p90 = pneg %p84
    %p91 = scmp.eq.s32.totalorder %s11, 1
    %p92 = por %p90, %p91
    %p93 = scmp.ne.s32.totalorder %s85, %s88
    %p94 = scmp.eq.s32.totalorder %s11, 0
    %p95 = por %p93, %p94
    %p96 = scmp.ne.s32.totalorder %s85, %s88
    %p97 = scmp.eq.s32.totalorder %s16, 1
    %p98 = por %p96, %p97
    %p99 = scmp.ne.s32.totalorder %s88, %s89
    %p100 = scmp.eq.s32.totalorder %s16, 0
    %p101 = por %p99, %p100
    %p102 = scmp.ne.s32.totalorder %s88, %s89
    %p103 = scmp.eq.s32.totalorder %s17, 1
    %p104 = por %p102, %p103
    %p106 = scmp.ne.s32.totalorder %s89, %s105
    %p107 = scmp.eq.s32.totalorder %s17, 0
    %p108 = por %p106, %p107
    %s109 = ssub.s32 %s19, %s26
    %p110 = scmp.eq.s32.totalorder %s109, 0
    %s112 = sadd.s32 %s111, 1
    %s113 = scalar_select %p110, %s111, %s112
    %p116 = pneg %p110
    %p117 = scmp.eq.s32.totalorder %s11, 1
    %p118 = por %p116, %p117
    %p119 = scmp.ne.s32.totalorder %s111, %s114
    %p120 = scmp.eq.s32.totalorder %s11, 0
    %p121 = por %p119, %p120
    %p122 = scmp.ne.s32.totalorder %s111, %s114
    %p123 = scmp.eq.s32.totalorder %s16, 1
    %p124 = por %p122, %p123
    %p125 = scmp.ne.s32.totalorder %s114, %s115
    %p126 = scmp.eq.s32.totalorder %s16, 0
    %p127 = por %p125, %p126
    %p128 = scmp.ne.s32.totalorder %s114, %s115
    %p129 = scmp.eq.s32.totalorder %s17, 1
    %p130 = por %p128, %p129
    %p132 = scmp.ne.s32.totalorder %s115, %s131
    %p133 = scmp.eq.s32.totalorder %s17, 0
    %p134 = por %p132, %p133
    %s135 = ssub.s32 %s19, %s26
    %p136 = scmp.eq.s32.totalorder %s135, 0
    %s138 = sadd.s32 %s137, 1
    %s139 = scalar_select %p136, %s137, %s138
    %p142 = pneg %p136
    %p143 = scmp.eq.s32.totalorder %s11, 1
    %p144 = por %p142, %p143
    %p145 = scmp.ne.s32.totalorder %s137, %s140
    %p146 = scmp.eq.s32.totalorder %s11, 0
    %p147 = por %p145, %p146
    %p148 = scmp.ne.s32.totalorder %s137, %s140
    %p149 = scmp.eq.s32.totalorder %s16, 1
    %p150 = por %p148, %p149
    %p151 = scmp.ne.s32.totalorder %s140, %s141
    %p152 = scmp.eq.s32.totalorder %s16, 0
    %p153 = por %p151, %p152
    %p154 = scmp.ne.s32.totalorder %s140, %s141
    %p155 = scmp.eq.s32.totalorder %s17, 1
    %p156 = por %p154, %p155
    %p158 = scmp.ne.s32.totalorder %s141, %s157
    %p159 = scmp.eq.s32.totalorder %s17, 0
    %p160 = por %p158, %p159
    %s161 = ssub.s32 %s18, %s30
    %p162 = scmp.eq.s32.totalorder %s161, 0
    %s164 = sadd.s32 %s163, 1
    %s165 = scalar_select %p162, %s163, %s164
    %p168 = pneg %p162
    %p169 = scmp.eq.s32.totalorder %s11, 1
    %p170 = por %p168, %p169
    %p171 = scmp.ne.s32.totalorder %s163, %s166
    %p172 = scmp.eq.s32.totalorder %s11, 0
    %p173 = por %p171, %p172
    %p174 = scmp.ne.s32.totalorder %s163, %s166
    %p175 = scmp.eq.s32.totalorder %s16, 1
    %p176 = por %p174, %p175
    %p177 = scmp.ne.s32.totalorder %s166, %s167
    %p178 = scmp.eq.s32.totalorder %s16, 0
    %p179 = por %p177, %p178
    %p180 = scmp.ne.s32.totalorder %s166, %s167
    %p181 = scmp.eq.s32.totalorder %s17, 1
    %p182 = por %p180, %p181
    %p184 = scmp.ne.s32.totalorder %s167, %s183
    %p185 = scmp.eq.s32.totalorder %s17, 0
    %p186 = por %p184, %p185
    %p187 = scmp.le.s32.totalorder 1, %s11
    %p188 = scmp.lt.s32.totalorder %s11, 3
    %p189 = pnand %p187, %p188
    %p190 = pneg %p189
    // Predicated region
    $region9: #{mixed_cox_loss_with_reg.1} parent=5 // pred_check
      _
    $region10: #{mixed_cox_loss_with_reg.1} parent=5 // pred_check_branch
      %192 = sbr.rel (%p189) target = $region12
    $region11: #{mixed_cox_loss_with_reg.1} parent=5 // pred_region
      %s193 = ssub.s32 %s11, 1
      // Predicated region
      $region13: #{mixed_cox_loss_with_reg.1} parent=11 // pred_check
        %p194 = pneg %p127
      $region14: #{mixed_cox_loss_with_reg.1} parent=11 // pred_check_branch
        %196 = sbr.rel (%p194) target = $region16
      $region15: #{mixed_cox_loss_with_reg.1} parent=11 // pred_region
        %s197 = smul.u32 32, %s21
        %p198 = scmp.lt.s32.totalorder %s197, 31
        %s199 = scalar_select %p198, %s197, 31
        %s200 = smul.addr %s199, 8
        %s201 = scalar_lea.vmem %s3, %s200
        %s202 = smul.u32 32, %s21
      $region16: #{mixed_cox_loss_with_reg.1} parent=11 // pred_fallthru
        _
      // Predicated region
      $region17: #{mixed_cox_loss_with_reg.1} parent=11 // pred_check
        %p203 = pneg %p153
      $region18: #{mixed_cox_loss_with_reg.1} parent=11 // pred_check_branch
        %205 = sbr.rel (%p203) target = $region20
      $region19: #{mixed_cox_loss_with_reg.1} parent=11 // pred_region
        %s206 = smul.u32 32, %s21
        %p207 = scmp.lt.s32.totalorder %s206, 31
        %s208 = scalar_select %p207, %s206, 31
        %s209 = smul.addr %s208, 8
        %s210 = scalar_lea.vmem %s4, %s209
        %s211 = smul.u32 32, %s21
      $region20: #{mixed_cox_loss_with_reg.1} parent=11 // pred_fallthru
        _
    $region12: #{mixed_cox_loss_with_reg.1} parent=5 // pred_fallthru
      _
    %p212 = scmp.lt.s32.totalorder %s11, 2
    // Predicated region
    $region21: #{mixed_cox_loss_with_reg.1} parent=5 // pred_check
      %p213 = pneg %p212
    $region22: #{mixed_cox_loss_with_reg.1} parent=5 // pred_check_branch
      %215 = sbr.rel (%p213) target = $region24
    $region23: #{mixed_cox_loss_with_reg.1} parent=5 // pred_region
      // Predicated region
      $region25: #{mixed_cox_loss_with_reg.1} parent=23 // pred_check
        %p216 = pneg %p43
      $region26: #{mixed_cox_loss_with_reg.1} parent=23 // pred_check_branch
        %218 = sbr.rel (%p216) target = $region28
      $region27: #{mixed_cox_loss_with_reg.1} parent=23 // pred_region
        %p219 = scmp.lt.s32.totalorder %s18, 1
        %s220 = scalar_select %p219, %s18, 1
        %s221 = scalar_lea.vmem %s0, %s220
      $region28: #{mixed_cox_loss_with_reg.1} parent=23 // pred_fallthru
        _
      // Predicated region
      $region29: #{mixed_cox_loss_with_reg.1} parent=23 // pred_check
        %p222 = pneg %p69
      $region30: #{mixed_cox_loss_with_reg.1} parent=23 // pred_check_branch
        %224 = sbr.rel (%p222) target = $region32
      $region31: #{mixed_cox_loss_with_reg.1} parent=23 // pred_region
        %p225 = scmp.lt.s32.totalorder %s18, 1
        %s226 = scalar_select %p225, %s18, 1
        %s227 = scalar_lea.vmem %s1, %s226
      $region32: #{mixed_cox_loss_with_reg.1} parent=23 // pred_fallthru
        _
      // Predicated region
      $region33: #{mixed_cox_loss_with_reg.1} parent=23 // pred_check
        %p228 = pneg %p95
      $region34: #{mixed_cox_loss_with_reg.1} parent=23 // pred_check_branch
        %230 = sbr.rel (%p228) target = $region36
      $region35: #{mixed_cox_loss_with_reg.1} parent=23 // pred_region
        %p231 = scmp.lt.s32.totalorder %s18, 1
        %s232 = scalar_select %p231, %s18, 1
        %s233 = scalar_lea.vmem %s2, %s232
      $region36: #{mixed_cox_loss_with_reg.1} parent=23 // pred_fallthru
        _
    $region24: #{mixed_cox_loss_with_reg.1} parent=5 // pred_fallthru
      _
    %p234 = scmp.le.s32.totalorder 1, %s11
    %p235 = scmp.lt.s32.totalorder %s11, 3
    %p236 = pnand %p234, %p235
    %p237 = pneg %p236
    // Predicated region
    $region37: #{mixed_cox_loss_with_reg.1} parent=5 // pred_check
      _
    $region38: #{mixed_cox_loss_with_reg.1} parent=5 // pred_check_branch
      %239 = sbr.rel (%p236) target = $region40
    $region39: #{mixed_cox_loss_with_reg.1} parent=5 // pred_region
      %s240 = ssub.s32 %s11, 1
      %p241 = scmp.lt.s32.totalorder %s20, 1
      %s242 = scalar_select %p241, %s20, 1
      %s243 = scalar_lea.vmem %s0, %s242
      %p244 = pneg %p49
      %p245 = pneg %p46
      %p246 = scmp.lt.s32.totalorder %s20, 1
      %s247 = scalar_select %p246, %s20, 1
      %s248 = scalar_lea.vmem %s1, %s247
      %p249 = pneg %p75
      %p250 = pneg %p72
      %p251 = scmp.lt.s32.totalorder %s20, 1
      %s252 = scalar_select %p251, %s20, 1
      %s253 = scalar_lea.vmem %s2, %s252
      %p254 = pneg %p101
      %p255 = pneg %p98
      %s256 = smul.u32 32, %s21
      %p257 = scmp.lt.s32.totalorder %s256, 31
      %s258 = scalar_select %p257, %s256, 31
      %s259 = smul.addr %s258, 8
      %s260 = scalar_lea.vmem %s3, %s259
      %p261 = pneg %p127
      %p262 = pneg %p124
      %s263 = smul.u32 32, %s21
      %p264 = scmp.lt.s32.totalorder %s263, 31
      %s265 = scalar_select %p264, %s263, 31
      %s266 = smul.addr %s265, 8
      %s267 = scalar_lea.vmem %s4, %s266
      %p268 = pneg %p153
      %p269 = pneg %p150
      %p270 = pneg %p179
      %p271 = pneg %p176
      %p272 = scmp.lt.s32.totalorder %s20, 1
      %s273 = scalar_select %p272, %s20, 1
      %s274 = scalar_lea.vmem %s5, %s273
      %p275 = scmp.lt.s32.totalorder %s20, 1
      %s276 = scalar_select %p275, %s20, 1
      %s277 = scalar_lea.vmem %s0, %s276
      %p278 = scmp.lt.s32.totalorder %s20, 1
      %s279 = scalar_select %p278, %s20, 1
      %s280 = scalar_lea.vmem %s1, %s279
      %p281 = scmp.lt.s32.totalorder %s20, 1
      %s282 = scalar_select %p281, %s20, 1
      %s283 = scalar_lea.vmem %s2, %s282
      %s284 = smul.u32 32, %s21
      %p285 = scmp.lt.s32.totalorder %s284, 31
      %s286 = scalar_select %p285, %s284, 31
      %s287 = smul.addr %s286, 8
      %s288 = scalar_lea.vmem %s3, %s287
      %s289 = smul.u32 32, %s21
      %s290 = smul.u32 32, %s21
      %p291 = scmp.lt.s32.totalorder %s290, 31
      %s292 = scalar_select %p291, %s290, 31
      %s293 = smul.addr %s292, 8
      %s294 = scalar_lea.vmem %s4, %s293
      %s295 = smul.u32 32, %s21
      %p296 = scmp.lt.s32.totalorder %s20, 1
      %s297 = scalar_select %p296, %s20, 1
      %s298 = scalar_lea.vmem %s5, %s297
      %p299 = scmp.eq.s32.totalorder %s21, 0
      // Predicated region
      $region41: #{mixed_cox_loss_with_reg.1} parent=39 // pred_check
        %p300 = pneg %p299
      $region42: #{mixed_cox_loss_with_reg.1} parent=39 // pred_check_branch
        %302 = sbr.rel (%p300) target = $region44
      $region43: #{mixed_cox_loss_with_reg.1} parent=39 // pred_region
        %303 = vst [vmem:[#allocation2] sm:$0x1] 0.0
      $region44: #{mixed_cox_loss_with_reg.1} parent=39 // pred_fallthru
        _
      %v304 = vld [vmem:[%s277] sm:$0x1]
      %v305 = vld [vmem:[%s288] sm:$0xff]
      %v306 = vld [vmem:[%s288 + $0x8] sm:$0xff]
      %v307 = vld [vmem:[%s288 + $0x10] sm:$0xff]
      %v308 = vld [vmem:[%s288 + $0x18] sm:$0xff]
      %v309 = vld [vmem:[%s288 + $0x20] sm:$0xff]
      %v310 = vld [vmem:[%s288 + $0x28] sm:$0xff]
      %v311 = vld [vmem:[%s288 + $0x30] sm:$0xff]
      %v312 = vld [vmem:[%s288 + $0x38] sm:$0xff]
      %v313 = vld [vmem:[%s288 + $0x40] sm:$0xff]
      %v314 = vld [vmem:[%s288 + $0x48] sm:$0xff]
      %v315 = vld [vmem:[%s288 + $0x50] sm:$0xff]
      %v316 = vld [vmem:[%s288 + $0x58] sm:$0xff]
      %v317 = vld [vmem:[%s288 + $0x60] sm:$0xff]
      %v318 = vld [vmem:[%s288 + $0x68] sm:$0xff]
      %v319 = vld [vmem:[%s288 + $0x70] sm:$0xff]
      %v320 = vld [vmem:[%s288 + $0x78] sm:$0xff]
      %v321 = vld [vmem:[%s288 + $0x80] sm:$0xff]
      %v322 = vld [vmem:[%s288 + $0x88] sm:$0xff]
      %v323 = vld [vmem:[%s288 + $0x90] sm:$0xff]
      %v324 = vld [vmem:[%s288 + $0x98] sm:$0xff]
      %v325 = vld [vmem:[%s288 + $0xa0] sm:$0xff]
      %v326 = vld [vmem:[%s288 + $0xa8] sm:$0xff]
      %v327 = vld [vmem:[%s288 + $0xb0] sm:$0xff]
      %v328 = vld [vmem:[%s288 + $0xb8] sm:$0xff]
      %v329 = vld [vmem:[%s288 + $0xc0] sm:$0xff]
      %v330 = vld [vmem:[%s288 + $0xc8] sm:$0xff]
      %v331 = vld [vmem:[%s288 + $0xd0] sm:$0xff]
      %v332 = vld [vmem:[%s288 + $0xd8] sm:$0xff]
      %v333 = vld [vmem:[%s288 + $0xe0] sm:$0xff]
      %v334 = vld [vmem:[%s288 + $0xe8] sm:$0xff]
      %v335 = vld [vmem:[%s288 + $0xf0] sm:$0xff]
      %v336 = vld [vmem:[%s288 + $0xf8] sm:$0xff]
      %v337 = vld [vmem:[%s294] sm:$0xff]
      %v338 = vld [vmem:[%s294 + $0x8] sm:$0xff]
      %v339 = vld [vmem:[%s294 + $0x10] sm:$0xff]
      %v340 = vld [vmem:[%s294 + $0x18] sm:$0xff]
      %v341 = vld [vmem:[%s294 + $0x20] sm:$0xff]
      %v342 = vld [vmem:[%s294 + $0x28] sm:$0xff]
      %v343 = vld [vmem:[%s294 + $0x30] sm:$0xff]
      %v344 = vld [vmem:[%s294 + $0x38] sm:$0xff]
      %v345 = vld [vmem:[%s294 + $0x40] sm:$0xff]
      %v346 = vld [vmem:[%s294 + $0x48] sm:$0xff]
      %v347 = vld [vmem:[%s294 + $0x50] sm:$0xff]
      %v348 = vld [vmem:[%s294 + $0x58] sm:$0xff]
      %v349 = vld [vmem:[%s294 + $0x60] sm:$0xff]
      %v350 = vld [vmem:[%s294 + $0x68] sm:$0xff]
      %v351 = vld [vmem:[%s294 + $0x70] sm:$0xff]
      %v352 = vld [vmem:[%s294 + $0x78] sm:$0xff]
      %v353 = vld [vmem:[%s294 + $0x80] sm:$0xff]
      %v354 = vld [vmem:[%s294 + $0x88] sm:$0xff]
      %v355 = vld [vmem:[%s294 + $0x90] sm:$0xff]
      %v356 = vld [vmem:[%s294 + $0x98] sm:$0xff]
      %v357 = vld [vmem:[%s294 + $0xa0] sm:$0xff]
      %v358 = vld [vmem:[%s294 + $0xa8] sm:$0xff]
      %v359 = vld [vmem:[%s294 + $0xb0] sm:$0xff]
      %v360 = vld [vmem:[%s294 + $0xb8] sm:$0xff]
      %v361 = vld [vmem:[%s294 + $0xc0] sm:$0xff]
      %v362 = vld [vmem:[%s294 + $0xc8] sm:$0xff]
      %v363 = vld [vmem:[%s294 + $0xd0] sm:$0xff]
      %v364 = vld [vmem:[%s294 + $0xd8] sm:$0xff]
      %v365 = vld [vmem:[%s294 + $0xe0] sm:$0xff]
      %v366 = vld [vmem:[%s294 + $0xe8] sm:$0xff]
      %v367 = vld [vmem:[%s294 + $0xf0] sm:$0xff]
      %v368 = vld [vmem:[%s294 + $0xf8] sm:$0xff]
      %v370 = vlaneseq
      %v371 = vshrl.u32 %v370, 7
      %v372 = vsub.s32 0, %v371
      %v373 = vrot.slane %v304, %v372
      %376 = vset.pattern.permute.xlu0 0
      %377 = vperm.xlu0 %376, %v305
      %v378 = vpop.permute.xlu0 %377
      %381 = vset.pattern.permute.xlu0 0
      %382 = vperm.xlu0 %381, %v306
      %v383 = vpop.permute.xlu0 %382
      %386 = vset.pattern.permute.xlu0 0
      %387 = vperm.xlu0 %386, %v307
      %v388 = vpop.permute.xlu0 %387
      %391 = vset.pattern.permute.xlu0 0
      %392 = vperm.xlu0 %391, %v308
      %v393 = vpop.permute.xlu0 %392
      %396 = vset.pattern.permute.xlu0 0
      %397 = vperm.xlu0 %396, %v309
      %v398 = vpop.permute.xlu0 %397
      %401 = vset.pattern.permute.xlu0 0
      %402 = vperm.xlu0 %401, %v310
      %v403 = vpop.permute.xlu0 %402
      %406 = vset.pattern.permute.xlu0 0
      %407 = vperm.xlu0 %406, %v311
      %v408 = vpop.permute.xlu0 %407
      %411 = vset.pattern.permute.xlu0 0
      %412 = vperm.xlu0 %411, %v312
      %v413 = vpop.permute.xlu0 %412
      %416 = vset.pattern.permute.xlu0 0
      %417 = vperm.xlu0 %416, %v313
      %v418 = vpop.permute.xlu0 %417
      %421 = vset.pattern.permute.xlu0 0
      %422 = vperm.xlu0 %421, %v314
      %v423 = vpop.permute.xlu0 %422
      %426 = vset.pattern.permute.xlu0 0
      %427 = vperm.xlu0 %426, %v315
      %v428 = vpop.permute.xlu0 %427
      %431 = vset.pattern.permute.xlu0 0
      %432 = vperm.xlu0 %431, %v316
      %v433 = vpop.permute.xlu0 %432
      %436 = vset.pattern.permute.xlu0 0
      %437 = vperm.xlu0 %436, %v317
      %v438 = vpop.permute.xlu0 %437
      %441 = vset.pattern.permute.xlu0 0
      %442 = vperm.xlu0 %441, %v318
      %v443 = vpop.permute.xlu0 %442
      %446 = vset.pattern.permute.xlu0 0
      %447 = vperm.xlu0 %446, %v319
      %v448 = vpop.permute.xlu0 %447
      %451 = vset.pattern.permute.xlu0 0
      %452 = vperm.xlu0 %451, %v320
      %v453 = vpop.permute.xlu0 %452
      %456 = vset.pattern.permute.xlu0 0
      %457 = vperm.xlu0 %456, %v321
      %v458 = vpop.permute.xlu0 %457
      %461 = vset.pattern.permute.xlu0 0
      %462 = vperm.xlu0 %461, %v322
      %v463 = vpop.permute.xlu0 %462
      %466 = vset.pattern.permute.xlu0 0
      %467 = vperm.xlu0 %466, %v323
      %v468 = vpop.permute.xlu0 %467
      %471 = vset.pattern.permute.xlu0 0
      %472 = vperm.xlu0 %471, %v324
      %v473 = vpop.permute.xlu0 %472
      %476 = vset.pattern.permute.xlu0 0
      %477 = vperm.xlu0 %476, %v325
      %v478 = vpop.permute.xlu0 %477
      %481 = vset.pattern.permute.xlu0 0
      %482 = vperm.xlu0 %481, %v326
      %v483 = vpop.permute.xlu0 %482
      %486 = vset.pattern.permute.xlu0 0
      %487 = vperm.xlu0 %486, %v327
      %v488 = vpop.permute.xlu0 %487
      %491 = vset.pattern.permute.xlu0 0
      %492 = vperm.xlu0 %491, %v328
      %v493 = vpop.permute.xlu0 %492
      %496 = vset.pattern.permute.xlu0 0
      %497 = vperm.xlu0 %496, %v329
      %v498 = vpop.permute.xlu0 %497
      %501 = vset.pattern.permute.xlu0 0
      %502 = vperm.xlu0 %501, %v330
      %v503 = vpop.permute.xlu0 %502
      %506 = vset.pattern.permute.xlu0 0
      %507 = vperm.xlu0 %506, %v331
      %v508 = vpop.permute.xlu0 %507
      %511 = vset.pattern.permute.xlu0 0
      %512 = vperm.xlu0 %511, %v332
      %v513 = vpop.permute.xlu0 %512
      %516 = vset.pattern.permute.xlu0 0
      %517 = vperm.xlu0 %516, %v333
      %v518 = vpop.permute.xlu0 %517
      %521 = vset.pattern.permute.xlu0 0
      %522 = vperm.xlu0 %521, %v334
      %v523 = vpop.permute.xlu0 %522
      %526 = vset.pattern.permute.xlu0 0
      %527 = vperm.xlu0 %526, %v335
      %v528 = vpop.permute.xlu0 %527
      %531 = vset.pattern.permute.xlu0 0
      %532 = vperm.xlu0 %531, %v336
      %v533 = vpop.permute.xlu0 %532
      %vm535 = vcmp.le.f32.partialorder %v373, %v378
      %vm536 = vcmp.le.f32.partialorder %v373, %v383
      %vm537 = vcmp.le.f32.partialorder %v373, %v388
      %vm538 = vcmp.le.f32.partialorder %v373, %v393
      %vm539 = vcmp.le.f32.partialorder %v373, %v398
      %vm540 = vcmp.le.f32.partialorder %v373, %v403
      %vm541 = vcmp.le.f32.partialorder %v373, %v408
      %vm542 = vcmp.le.f32.partialorder %v373, %v413
      %vm543 = vcmp.le.f32.partialorder %v373, %v418
      %vm544 = vcmp.le.f32.partialorder %v373, %v423
      %vm545 = vcmp.le.f32.partialorder %v373, %v428
      %vm546 = vcmp.le.f32.partialorder %v373, %v433
      %vm547 = vcmp.le.f32.partialorder %v373, %v438
      %vm548 = vcmp.le.f32.partialorder %v373, %v443
      %vm549 = vcmp.le.f32.partialorder %v373, %v448
      %vm550 = vcmp.le.f32.partialorder %v373, %v453
      %vm551 = vcmp.le.f32.partialorder %v373, %v458
      %vm552 = vcmp.le.f32.partialorder %v373, %v463
      %vm553 = vcmp.le.f32.partialorder %v373, %v468
      %vm554 = vcmp.le.f32.partialorder %v373, %v473
      %vm555 = vcmp.le.f32.partialorder %v373, %v478
      %vm556 = vcmp.le.f32.partialorder %v373, %v483
      %vm557 = vcmp.le.f32.partialorder %v373, %v488
      %vm558 = vcmp.le.f32.partialorder %v373, %v493
      %vm559 = vcmp.le.f32.partialorder %v373, %v498
      %vm560 = vcmp.le.f32.partialorder %v373, %v503
      %vm561 = vcmp.le.f32.partialorder %v373, %v508
      %vm562 = vcmp.le.f32.partialorder %v373, %v513
      %vm563 = vcmp.le.f32.partialorder %v373, %v518
      %vm564 = vcmp.le.f32.partialorder %v373, %v523
      %vm565 = vcmp.le.f32.partialorder %v373, %v528
      %vm566 = vcmp.le.f32.partialorder %v373, %v533
      %568 = vset.pattern.permute.xlu0 0
      %569 = vperm.xlu0 %568, %v337
      %v570 = vpop.permute.xlu0 %569
      %573 = vset.pattern.permute.xlu0 0
      %574 = vperm.xlu0 %573, %v338
      %v575 = vpop.permute.xlu0 %574
      %578 = vset.pattern.permute.xlu0 0
      %579 = vperm.xlu0 %578, %v339
      %v580 = vpop.permute.xlu0 %579
      %583 = vset.pattern.permute.xlu0 0
      %584 = vperm.xlu0 %583, %v340
      %v585 = vpop.permute.xlu0 %584
      %588 = vset.pattern.permute.xlu0 0
      %589 = vperm.xlu0 %588, %v341
      %v590 = vpop.permute.xlu0 %589
      %593 = vset.pattern.permute.xlu0 0
      %594 = vperm.xlu0 %593, %v342
      %v595 = vpop.permute.xlu0 %594
      %598 = vset.pattern.permute.xlu0 0
      %599 = vperm.xlu0 %598, %v343
      %v600 = vpop.permute.xlu0 %599
      %603 = vset.pattern.permute.xlu0 0
      %604 = vperm.xlu0 %603, %v344
      %v605 = vpop.permute.xlu0 %604
      %608 = vset.pattern.permute.xlu0 0
      %609 = vperm.xlu0 %608, %v345
      %v610 = vpop.permute.xlu0 %609
      %613 = vset.pattern.permute.xlu0 0
      %614 = vperm.xlu0 %613, %v346
      %v615 = vpop.permute.xlu0 %614
      %618 = vset.pattern.permute.xlu0 0
      %619 = vperm.xlu0 %618, %v347
      %v620 = vpop.permute.xlu0 %619
      %623 = vset.pattern.permute.xlu0 0
      %624 = vperm.xlu0 %623, %v348
      %v625 = vpop.permute.xlu0 %624
      %628 = vset.pattern.permute.xlu0 0
      %629 = vperm.xlu0 %628, %v349
      %v630 = vpop.permute.xlu0 %629
      %633 = vset.pattern.permute.xlu0 0
      %634 = vperm.xlu0 %633, %v350
      %v635 = vpop.permute.xlu0 %634
      %638 = vset.pattern.permute.xlu0 0
      %639 = vperm.xlu0 %638, %v351
      %v640 = vpop.permute.xlu0 %639
      %643 = vset.pattern.permute.xlu0 0
      %644 = vperm.xlu0 %643, %v352
      %v645 = vpop.permute.xlu0 %644
      %648 = vset.pattern.permute.xlu0 0
      %649 = vperm.xlu0 %648, %v353
      %v650 = vpop.permute.xlu0 %649
      %653 = vset.pattern.permute.xlu0 0
      %654 = vperm.xlu0 %653, %v354
      %v655 = vpop.permute.xlu0 %654
      %658 = vset.pattern.permute.xlu0 0
      %659 = vperm.xlu0 %658, %v355
      %v660 = vpop.permute.xlu0 %659
      %663 = vset.pattern.permute.xlu0 0
      %664 = vperm.xlu0 %663, %v356
      %v665 = vpop.permute.xlu0 %664
      %668 = vset.pattern.permute.xlu0 0
      %669 = vperm.xlu0 %668, %v357
      %v670 = vpop.permute.xlu0 %669
      %673 = vset.pattern.permute.xlu0 0
      %674 = vperm.xlu0 %673, %v358
      %v675 = vpop.permute.xlu0 %674
      %678 = vset.pattern.permute.xlu0 0
      %679 = vperm.xlu0 %678, %v359
      %v680 = vpop.permute.xlu0 %679
      %683 = vset.pattern.permute.xlu0 0
      %684 = vperm.xlu0 %683, %v360
      %v685 = vpop.permute.xlu0 %684
      %688 = vset.pattern.permute.xlu0 0
      %689 = vperm.xlu0 %688, %v361
      %v690 = vpop.permute.xlu0 %689
      %693 = vset.pattern.permute.xlu0 0
      %694 = vperm.xlu0 %693, %v362
      %v695 = vpop.permute.xlu0 %694
      %698 = vset.pattern.permute.xlu0 0
      %699 = vperm.xlu0 %698, %v363
      %v700 = vpop.permute.xlu0 %699
      %703 = vset.pattern.permute.xlu0 0
      %704 = vperm.xlu0 %703, %v364
      %v705 = vpop.permute.xlu0 %704
      %708 = vset.pattern.permute.xlu0 0
      %709 = vperm.xlu0 %708, %v365
      %v710 = vpop.permute.xlu0 %709
      %713 = vset.pattern.permute.xlu0 0
      %714 = vperm.xlu0 %713, %v366
      %v715 = vpop.permute.xlu0 %714
      %718 = vset.pattern.permute.xlu0 0
      %719 = vperm.xlu0 %718, %v367
      %v720 = vpop.permute.xlu0 %719
      %723 = vset.pattern.permute.xlu0 0
      %724 = vperm.xlu0 %723, %v368
      %v725 = vpop.permute.xlu0 %724
      %v727 = vsel %vm535, %v570, 0.0
      %v728 = vsel %vm536, %v575, 0.0
      %v729 = vsel %vm537, %v580, 0.0
      %v730 = vsel %vm538, %v585, 0.0
      %v731 = vsel %vm539, %v590, 0.0
      %v732 = vsel %vm540, %v595, 0.0
      %v733 = vsel %vm541, %v600, 0.0
      %v734 = vsel %vm542, %v605, 0.0
      %v735 = vsel %vm543, %v610, 0.0
      %v736 = vsel %vm544, %v615, 0.0
      %v737 = vsel %vm545, %v620, 0.0
      %v738 = vsel %vm546, %v625, 0.0
      %v739 = vsel %vm547, %v630, 0.0
      %v740 = vsel %vm548, %v635, 0.0
      %v741 = vsel %vm549, %v640, 0.0
      %v742 = vsel %vm550, %v645, 0.0
      %v743 = vsel %vm551, %v650, 0.0
      %v744 = vsel %vm552, %v655, 0.0
      %v745 = vsel %vm553, %v660, 0.0
      %v746 = vsel %vm554, %v665, 0.0
      %v747 = vsel %vm555, %v670, 0.0
      %v748 = vsel %vm556, %v675, 0.0
      %v749 = vsel %vm557, %v680, 0.0
      %v750 = vsel %vm558, %v685, 0.0
      %v751 = vsel %vm559, %v690, 0.0
      %v752 = vsel %vm560, %v695, 0.0
      %v753 = vsel %vm561, %v700, 0.0
      %v754 = vsel %vm562, %v705, 0.0
      %v755 = vsel %vm563, %v710, 0.0
      %v756 = vsel %vm564, %v715, 0.0
      %v757 = vsel %vm565, %v720, 0.0
      %v758 = vsel %vm566, %v725, 0.0
      %v759 = vld [vmem:[#allocation2] sm:$0x1]
      %v760 = vadd.f32 %v727, %v728
      %v761 = vadd.f32 %v760, %v729
      %v762 = vadd.f32 %v761, %v730
      %v763 = vadd.f32 %v762, %v731
      %v764 = vadd.f32 %v763, %v732
      %v765 = vadd.f32 %v764, %v733
      %v766 = vadd.f32 %v765, %v734
      %v767 = vadd.f32 %v766, %v735
      %v768 = vadd.f32 %v767, %v736
      %v769 = vadd.f32 %v768, %v737
      %v770 = vadd.f32 %v769, %v738
      %v771 = vadd.f32 %v770, %v739
      %v772 = vadd.f32 %v771, %v740
      %v773 = vadd.f32 %v772, %v741
      %v774 = vadd.f32 %v773, %v742
      %v775 = vadd.f32 %v774, %v743
      %v776 = vadd.f32 %v775, %v744
      %v777 = vadd.f32 %v776, %v745
      %v778 = vadd.f32 %v777, %v746
      %v779 = vadd.f32 %v778, %v747
      %v780 = vadd.f32 %v779, %v748
      %v781 = vadd.f32 %v780, %v749
      %v782 = vadd.f32 %v781, %v750
      %v783 = vadd.f32 %v782, %v751
      %v784 = vadd.f32 %v783, %v752
      %v785 = vadd.f32 %v784, %v753
      %v786 = vadd.f32 %v785, %v754
      %v787 = vadd.f32 %v786, %v755
      %v788 = vadd.f32 %v787, %v756
      %v789 = vadd.f32 %v788, %v757
      %v790 = vadd.f32 %v789, %v758
      %v791 = vrot.slane %v790, 4
      %v792 = vadd.f32 %v790, %v791
      %v793 = vrot.slane %v792, 2
      %v794 = vadd.f32 %v792, %v793
      %v795 = vrot.slane %v794, 1
      %v796 = vadd.f32 %v794, %v795
      %v797 = vadd.f32 %v759, %v796
      %798 = vst [vmem:[#allocation2] sm:$0x1] %v797
      // Predicated region
      $region45: #{mixed_cox_loss_with_reg.1} parent=39 // pred_check
        %p799 = pneg %p299
      $region46: #{mixed_cox_loss_with_reg.1} parent=39 // pred_check_branch
        %801 = sbr.rel (%p799) target = $region48
      $region47: #{mixed_cox_loss_with_reg.1} parent=39 // pred_region
        %v802 = vld [vmem:[%s283] sm:$0x1]
        %v803 = vld [vmem:[#allocation2] sm:$0x1]
        %v804 = vlog2.pop %v803
        %v805 = vmul.f32 %v804, 0.6931472
        %v806 = vsub.f32 %v802, %v805
        %v807 = vld [vmem:[%s280] sm:$0x1]
        %v808 = vmul.f32 %v806, %v807
        %809 = vst [vmem:[%s298] sm:$0x1] %v808
      $region48: #{mixed_cox_loss_with_reg.1} parent=39 // pred_fallthru
        _
      %p810 = scmp.lt.s32.totalorder %s20, 1
      %s811 = scalar_select %p810, %s20, 1
      %s812 = scalar_lea.vmem %s5, %s811
      // Predicated region
      $region49: #{mixed_cox_loss_with_reg.1} parent=39 // pred_check
        %p813 = pneg %p176
      $region50: #{mixed_cox_loss_with_reg.1} parent=39 // pred_check_branch
        %815 = sbr.rel (%p813) target = $region52
      $region51: #{mixed_cox_loss_with_reg.1} parent=39 // pred_region
        _
      $region52: #{mixed_cox_loss_with_reg.1} parent=39 // pred_fallthru
        _
    $region40: #{mixed_cox_loss_with_reg.1} parent=5 // pred_fallthru
      _
    %p816 = scmp.le.s32.totalorder 2, %s11
    // Predicated region
    $region53: #{mixed_cox_loss_with_reg.1} parent=5 // pred_check
      %p817 = pneg %p816
    $region54: #{mixed_cox_loss_with_reg.1} parent=5 // pred_check_branch
      %819 = sbr.rel (%p817) target = $region56
    $region55: #{mixed_cox_loss_with_reg.1} parent=5 // pred_region
      %s820 = ssub.s32 %s11, 2
      // Predicated region
      $region57: #{mixed_cox_loss_with_reg.1} parent=55 // pred_check
        %p821 = pneg %p182
      $region58: #{mixed_cox_loss_with_reg.1} parent=55 // pred_check_branch
        %823 = sbr.rel (%p821) target = $region60
      $region59: #{mixed_cox_loss_with_reg.1} parent=55 // pred_region
        %p824 = scmp.lt.s32.totalorder %s22, 1
        %s825 = scalar_select %p824, %s22, 1
        %s826 = scalar_lea.vmem %s5, %s825
      $region60: #{mixed_cox_loss_with_reg.1} parent=55 // pred_fallthru
        _
    $region56: #{mixed_cox_loss_with_reg.1} parent=5 // pred_fallthru
      _
  $region6: #{mixed_cox_loss_with_reg.1} parent=0 // loop_footer
    %s15 = sadd.s32 1, %s11
  $region7: #{mixed_cox_loss_with_reg.1} parent=0 // loop_footer_branch
    %10 = sbr.rel target = $region3
  $region8: #{mixed_cox_loss_with_reg.1} parent=0 // loop_exit
    _

</llo_original>
